<compile_context>
chip_gen: v6e
topology: v6e:2x2x1
jax: 0.10.0
libtpu: 0.0.40
codegen_flags: <defaults>
</compile_context>

<pallas_src>
import functools
import math

import jax
import jax.numpy as jnp
from jax.experimental import pallas as pl
from jax.experimental.pallas import tpu as pltpu


_EPS = 1e-5
_MAX_SEG_WIDTH = 2048          # above this the (W, W) segment matrix is too big; use XLU sum
_MAX_TILE_ROWS = 8192


def _round_up(a: int, b: int) -> int:
    return (a + b - 1) // b * b


def _cdiv(a: int, b: int) -> int:
    return -(-a // b)


def _hw_budgets():
    """Per-generation (vmem_limit_bytes, target_block_bytes)."""
    cap = None
    try:
        cap = getattr(pltpu.get_tpu_info(), "vmem_capacity_bytes", None)
    except Exception:
        cap = None
    if cap is None:
        try:
            kind = jax.devices()[0].device_kind.lower()
            cap = 64 * 1024 * 1024 if ("v7" in kind or "7x" in kind) else 128 * 1024 * 1024
        except Exception:
            cap = 64 * 1024 * 1024
    if cap <= 64 * 1024 * 1024:                     # v7x: 64 MiB physical VMEM per TC
        return 32 * 1024 * 1024, 1 * 1024 * 1024
    return 64 * 1024 * 1024, 2 * 1024 * 1024        # v5e / v6e: 128 MiB physical VMEM


def _is_v5() -> bool:
    try:
        return "v5" in jax.devices()[0].device_kind.lower()
    except Exception:
        return True   # conservative: unknown chip -> no bf16 VPU assumed


def _segmented_sum(v32, seg_bf16):
    """~f32-exact segmented lane sum via two bf16 MXU passes.

    seg is an exact 0/1 block-diagonal matrix, so splitting the f32 operand into
    hi/lo bf16 parts keeps every product exact; accumulation is f32."""
    hi = v32.astype(jnp.bfloat16)
    lo = (v32 - hi.astype(jnp.float32)).astype(jnp.bfloat16)
    return (jnp.dot(hi, seg_bf16, preferred_element_type=jnp.float32)
            + jnp.dot(lo, seg_bf16, preferred_element_type=jnp.float32))


def _biasfree_ln_kernel(x_ref, w_ref, seg_ref, o_ref, *, inv_c, use_mxu, native_out):
    # x_ref/o_ref: (TILE_P, W); w_ref: (1, W); seg_ref: (W, W) 0/1 block-diagonal (bf16).
    x32 = x_ref[...].astype(jnp.float32)

    # Per-row mean.  MXU path returns it already broadcast over each C-lane group.
    if use_mxu:
        seg = seg_ref[...]
        mean = _segmented_sum(x32, seg) * inv_c                   # (TILE_P, W)
    else:
        mean = jnp.sum(x32, axis=-1, keepdims=True) * inv_c       # (TILE_P, 1)

    # Two-pass biased variance: E[(x - mean)^2]  (avoids E[x^2]-mean^2 cancellation).
    xc = x32 - mean
    sq = xc * xc
    if use_mxu:
        var = _segmented_sum(sq, seg) * inv_c
    else:
        var = jnp.sum(sq, axis=-1, keepdims=True) * inv_c

    scale = jax.lax.rsqrt(jnp.maximum(var, 0.0) + _EPS)           # EUP rsqrt

    w32 = w_ref[...].astype(jnp.float32)                          # tiny resident block
    if native_out:
        # bf16 VPU multiply on the store pass (v6e / v7x only).
        o_ref[...] = (x_ref[...] * (scale * w32).astype(x_ref.dtype)).astype(o_ref.dtype)
    else:
        # Re-read x so the f32 tile copy above need not stay live until the store.
        o_ref[...] = (x_ref[...].astype(jnp.float32) * scale * w32).astype(o_ref.dtype)


@jax.jit
def biasfree_layernorm(x, weight):
    """x: (..., C), weight: (C,).  Returns same shape and dtype as x."""
    orig_shape = x.shape
    C = orig_shape[-1]
    M = 1
    for d in orig_shape[:-1]:
        M *= d

    # ---- lane packing: fold g rows into the lane axis (free row-major reshape) ----
    g = 128 // math.gcd(C, 128)
    W = g * C
    if g > 1 and ((M % g) != 0 or W > _MAX_SEG_WIDTH):
        g, W = 1, C                                   # fallback: unpacked rows
    Mp = M // g
    xp = x.reshape(Mp, W)
    use_mxu = W <= _MAX_SEG_WIDTH

    # Weight replicated across the g packed rows; stays resident in VMEM.
    wp = jnp.tile(weight, g).reshape(1, W)

    # Block-diagonal 0/1 segment matrix (constant-folded by XLA; resident in VMEM).
    if use_mxu:
        lane_group = jnp.arange(W, dtype=jnp.int32) // C
        seg = (lane_group[:, None] == lane_group[None, :]).astype(jnp.bfloat16)
    else:
        seg = jnp.zeros((8, 128), dtype=jnp.bfloat16)   # unused dummy (XLU-sum path)

    # ---- tile sizing: use the physically padded lane width and per-chip budgets ----
    vmem_limit, target_block = _hw_budgets()
    itemsize = jnp.dtype(x.dtype).itemsize
    sub = 8 if itemsize >= 4 else (16 if itemsize == 2 else 32)
    w_phys = _round_up(W, 128)                         # lanes actually occupied in VMEM
    tile_p = max(sub, (target_block // (w_phys * itemsize)) // sub * sub)
    tile_p = min(tile_p, _MAX_TILE_ROWS, Mp)           # tile_p == Mp (full dim) is legal
    grid = _cdiv(Mp, tile_p)                           # last block clipped by Pallas

    native_out = (x.dtype == jnp.bfloat16) and (not _is_v5())
    kernel = functools.partial(_biasfree_ln_kernel, inv_c=1.0 / C,
                               use_mxu=use_mxu, native_out=native_out)

    out = pl.pallas_call(
        kernel,
        out_shape=jax.ShapeDtypeStruct((Mp, W), x.dtype),
        grid_spec=pltpu.PrefetchScalarGridSpec(
            num_scalar_prefetch=0,
            grid=(grid,),
            in_specs=[
                pl.BlockSpec((tile_p, W), lambda i: (i, 0)),
                pl.BlockSpec((1, W), lambda i: (0, 0)),        # weight: resident
                pl.BlockSpec(seg.shape, lambda i: (0, 0)),     # segment matrix: resident
            ],
            out_specs=pl.BlockSpec((tile_p, W), lambda i: (i, 0)),
        ),
        compiler_params=pltpu.CompilerParams(
            # TODO(synk): on v7x verify both TensorCores are busy in the profile; if not,
            # switch this axis to pltpu.CORE_PARALLEL (or an explicit leading core axis).
            dimension_semantics=("parallel",),
            vmem_limit_bytes=vmem_limit,
        ),
    )(xp, wp, seg)

    return out.reshape(orig_shape)


def _reference(x, weight):
    x32 = x.astype(jnp.float32)
    var = jnp.var(x32, axis=-1, keepdims=True)         # unbiased=False
    y = x32 / jnp.sqrt(var + 1e-5) * weight.astype(jnp.float32)
    return y.astype(x.dtype)


if __name__ == "__main__":
    key = jax.random.PRNGKey(0)

    # FSAS usage: (B, H*W, C) with C the normalized dim; module init weight = ones(C).
    B, N, C = 2, 8, 32
    x = jax.random.normal(key, (B, N, C), dtype=jnp.float32)
    weight = jnp.ones((C,), dtype=jnp.float32)

    y = biasfree_layernorm(x, weight)                   # packed path: g=4, W=128
    jax.block_until_ready(y)
    assert y.shape == x.shape and y.dtype == x.dtype
    assert jnp.allclose(y, _reference(x, weight), atol=1e-4, rtol=1e-4), "mismatch vs reference"

    # Ragged row count (M % g != 0) with non-trivial weight -> unpacked fallback + edge clip.
    x2 = jax.random.normal(jax.random.PRNGKey(1), (3, 7, 48), dtype=jnp.float32)
    w2 = jax.random.normal(jax.random.PRNGKey(2), (48,), dtype=jnp.float32)
    y2 = biasfree_layernorm(x2, w2)
    jax.block_until_ready(y2)
    assert y2.shape == x2.shape and y2.dtype == x2.dtype
    assert jnp.allclose(y2, _reference(x2, w2), atol=1e-4, rtol=1e-4), "ragged mismatch"

    # C=48 with M divisible by g=8 -> packed path with W=384.
    x3 = jax.random.normal(jax.random.PRNGKey(3), (2, 64, 48), dtype=jnp.float32)
    w3 = jax.random.normal(jax.random.PRNGKey(4), (48,), dtype=jnp.float32)
    y3 = biasfree_layernorm(x3, w3)
    jax.block_until_ready(y3)
    assert jnp.allclose(y3, _reference(x3, w3), atol=1e-4, rtol=1e-4), "packed C=48 mismatch"

    # bf16 I/O (native bf16 store-pass multiply on v6e/v7x; f32 path on v5e).
    x4 = jax.random.normal(jax.random.PRNGKey(5), (2, 32, 32), dtype=jnp.bfloat16)
    w4 = jnp.ones((32,), dtype=jnp.float32)
    y4 = biasfree_layernorm(x4, w4)
    jax.block_until_ready(y4)
    assert y4.shape == x4.shape and y4.dtype == x4.dtype
    assert jnp.allclose(y4.astype(jnp.float32),
                        _reference(x4, w4).astype(jnp.float32),
                        atol=3e-2, rtol=3e-2), "bf16 mismatch"

    print("KERNEL_OK")
</pallas_src>

<mosaic_0001>
module attributes {stable_mosaic.version = 11 : i64} {
  func.func @_biasfree_ln_kernel(%arg0: i32, %arg1: memref<4x128xf32, #tpu.memory_space<vmem>>, %arg2: memref<1x128xf32, #tpu.memory_space<vmem>>, %arg3: memref<128x128xbf16, #tpu.memory_space<vmem>>, %arg4: memref<4x128xf32, #tpu.memory_space<vmem>>) attributes {dimension_semantics = [#tpu.dimension_semantics<parallel>], iteration_bounds = array<i64: 1>, scalar_prefetch = 0 : i64, scratch_operands = 0 : i64, tpu.core_type = #tpu.core_type<tc>, window_params = [{transform_indices = @transform_0, window_bounds = array<i64: 4, 128>}, {pipeline_mode = #tpu.pipeline_mode<synchronous>, transform_indices = @transform_1, window_bounds = array<i64: 1, 128>}, {pipeline_mode = #tpu.pipeline_mode<synchronous>, transform_indices = @transform_2, window_bounds = array<i64: 128, 128>}, {transform_indices = @transform_3, window_bounds = array<i64: 4, 128>}]} {
    %c0 = arith.constant 0 : index
    %c0_0 = arith.constant 0 : index
    %0 = vector.load %arg1[%c0, %c0_0] : memref<4x128xf32, #tpu.memory_space<vmem>>, vector<4x128xf32>
    %c0_1 = arith.constant 0 : index
    %c0_2 = arith.constant 0 : index
    %1 = vector.load %arg3[%c0_1, %c0_2] : memref<128x128xbf16, #tpu.memory_space<vmem>>, vector<128x128xbf16>
    %2 = arith.truncf %0 : vector<4x128xf32> to vector<4x128xbf16>
    %3 = arith.extf %2 : vector<4x128xbf16> to vector<4x128xf32>
    %4 = arith.subf %0, %3 : vector<4x128xf32>
    %5 = arith.truncf %4 : vector<4x128xf32> to vector<4x128xbf16>
    %cst = arith.constant dense<0.000000e+00> : vector<4x128xf32>
    %6 = tpu.matmul %2, %1, %cst {dimension_numbers = #tpu.dot_dimension_numbers<[1], [0], [0], [1], [0, 0, 1, 1], [], []>} : vector<4x128xbf16>, vector<128x128xbf16>, vector<4x128xf32> -> vector<4x128xf32>
    %cst_3 = arith.constant dense<0.000000e+00> : vector<4x128xf32>
    %7 = tpu.matmul %5, %1, %cst_3 {dimension_numbers = #tpu.dot_dimension_numbers<[1], [0], [0], [1], [0, 0, 1, 1], [], []>} : vector<4x128xbf16>, vector<128x128xbf16>, vector<4x128xf32> -> vector<4x128xf32>
    %8 = arith.addf %6, %7 : vector<4x128xf32>
    %cst_4 = arith.constant 3.125000e-02 : f32
    %9 = vector.broadcast %cst_4 : f32 to vector<4x128xf32>
    %10 = arith.mulf %8, %9 : vector<4x128xf32>
    %11 = arith.subf %0, %10 : vector<4x128xf32>
    %12 = arith.mulf %11, %11 : vector<4x128xf32>
    %13 = arith.truncf %12 : vector<4x128xf32> to vector<4x128xbf16>
    %14 = arith.extf %13 : vector<4x128xbf16> to vector<4x128xf32>
    %15 = arith.subf %12, %14 : vector<4x128xf32>
    %16 = arith.truncf %15 : vector<4x128xf32> to vector<4x128xbf16>
    %cst_5 = arith.constant dense<0.000000e+00> : vector<4x128xf32>
    %17 = tpu.matmul %13, %1, %cst_5 {dimension_numbers = #tpu.dot_dimension_numbers<[1], [0], [0], [1], [0, 0, 1, 1], [], []>} : vector<4x128xbf16>, vector<128x128xbf16>, vector<4x128xf32> -> vector<4x128xf32>
    %cst_6 = arith.constant dense<0.000000e+00> : vector<4x128xf32>
    %18 = tpu.matmul %16, %1, %cst_6 {dimension_numbers = #tpu.dot_dimension_numbers<[1], [0], [0], [1], [0, 0, 1, 1], [], []>} : vector<4x128xbf16>, vector<128x128xbf16>, vector<4x128xf32> -> vector<4x128xf32>
    %19 = arith.addf %17, %18 : vector<4x128xf32>
    %cst_7 = arith.constant 3.125000e-02 : f32
    %20 = vector.broadcast %cst_7 : f32 to vector<4x128xf32>
    %21 = arith.mulf %19, %20 : vector<4x128xf32>
    %cst_8 = arith.constant 0.000000e+00 : f32
    %22 = vector.broadcast %cst_8 : f32 to vector<4x128xf32>
    %23 = arith.maximumf %21, %22 : vector<4x128xf32>
    %cst_9 = arith.constant 9.99999974E-6 : f32
    %24 = vector.broadcast %cst_9 : f32 to vector<4x128xf32>
    %25 = arith.addf %23, %24 : vector<4x128xf32>
    %26 = math.rsqrt %25 : vector<4x128xf32>
    %c0_10 = arith.constant 0 : index
    %c0_11 = arith.constant 0 : index
    %27 = vector.load %arg2[%c0_10, %c0_11] : memref<1x128xf32, #tpu.memory_space<vmem>>, vector<1x128xf32>
    %c0_12 = arith.constant 0 : index
    %c0_13 = arith.constant 0 : index
    %28 = vector.load %arg1[%c0_12, %c0_13] : memref<4x128xf32, #tpu.memory_space<vmem>>, vector<4x128xf32>
    %29 = arith.mulf %28, %26 : vector<4x128xf32>
    %30 = vector.broadcast %27 : vector<1x128xf32> to vector<4x128xf32>
    %31 = arith.mulf %29, %30 : vector<4x128xf32>
    %c0_14 = arith.constant 0 : index
    %c0_15 = arith.constant 0 : index
    %32 = vector.load %arg4[%c0_14, %c0_15] : memref<4x128xf32, #tpu.memory_space<vmem>>, vector<4x128xf32>
    tpu.vector_store %arg4[%c0_14, %c0_15], %31 {strides = array<i32>} : memref<4x128xf32, #tpu.memory_space<vmem>>, vector<4x128xf32>,
    return
  }
  func.func @transform_0(%arg0: i32) -> (i32, i32) {
    %c0_i32 = arith.constant 0 : i32
    %c0_i32_0 = arith.constant 0 : i32
    return %arg0, %c0_i32 : i32, i32
  }
  func.func @transform_1(%arg0: i32) -> (i32, i32) {
    %c0_i32 = arith.constant 0 : i32
    %c0_i32_0 = arith.constant 0 : i32
    %c0_i32_1 = arith.constant 0 : i32
    return %c0_i32, %c0_i32_0 : i32, i32
  }
  func.func @transform_2(%arg0: i32) -> (i32, i32) {
    %c0_i32 = arith.constant 0 : i32
    %c0_i32_0 = arith.constant 0 : i32
    %c0_i32_1 = arith.constant 0 : i32
    return %c0_i32, %c0_i32_0 : i32, i32
  }
  func.func @transform_3(%arg0: i32) -> (i32, i32) {
    %c0_i32 = arith.constant 0 : i32
    %c0_i32_0 = arith.constant 0 : i32
    return %arg0, %c0_i32 : i32, i32
  }
}

</mosaic_0001>

<llo_original>
// kernel: tile.9
$region0: #{tile.9}
  %s0 = inlined_call_operand.vmem [shape: f32[4,32], index: 0, kind: input, shape index: {}]
  %s1 = inlined_call_operand.vmem [shape: f32[1,128], index: 1, kind: output, shape index: {}]
  $region1: #{tile.9} parent=0
    #allocation0 [shape = 'u8[4096]{0}', space=vmem, size = 0x1000, scoped, tag = 'scoped mem for output reshape']
    #allocation1 [shape = 'u8[4096]{0}', space=vmem, size = 0x1000, scoped, tag = 'scoped mem for input reshape']
    %s3 = sshll.u32 1, 4
    %s4 = ssub.s32 %s3, 1
    %v5 = vld [vmem:[%s0] sm:%s4]
    %6 = vst [vmem:[#allocation1] sm:%s4] %v5
    %v7 = vld [vmem:[#allocation1] sm:$0x1]
    %vm8 = vcmask 261120
    %9 = vst.msk [vmem:[#allocation0] sm:$0x1] %vm8, %v7
    %s10 = scalar_lea.vmem [#allocation1], 3
    %v11 = vld [vmem:[%s10] sm:$0x1]
    %12 = vrot.lane.b32.xlu0 %v11, 96
    %v13 = vpop.permute.xlu0 %12
    %vm14 = vcmask 1048320
    %15 = vst.msk [vmem:[#allocation0] sm:$0x1] %vm14, %v13
    %s16 = scalar_lea.vmem [#allocation1], 2
    %v17 = vld [vmem:[%s16] sm:$0x1]
    %18 = vrot.lane.b32.xlu0 %v17, 64
    %v19 = vpop.permute.xlu0 %18
    %vm20 = vcmask 785920
    %21 = vst.msk [vmem:[#allocation0] sm:$0x1] %vm20, %v19
    %s22 = scalar_lea.vmem [#allocation1], 1
    %v23 = vld [vmem:[%s22] sm:$0x1]
    %24 = vrot.lane.b32.xlu0 %v23, 32
    %v25 = vpop.permute.xlu0 %24
    %vm26 = vcmask 523520
    %27 = vst.msk [vmem:[#allocation0] sm:$0x1] %vm26, %v25
    %s29 = sshll.u32 1, 1
    %s30 = ssub.s32 %s29, 1
    %v32 = vld [vmem:[#allocation0] sm:%s30]
    %s33 = sshll.u32 1, 1
    %s34 = ssub.s32 %s33, 1
    %35 = vst [vmem:[%s1] sm:%s34] %v32

// kernel: tile.8
$region0: #{tile.8}
  #allocation0 [shape = 's32[1]{0}', space=sflag, size = 0x4, scoped, tag = 'scoped memory for tile.8']
  %s0 = inlined_call_operand.vmem [shape: f32[32], index: 0, kind: input, shape index: {}]
  %s1 = inlined_call_operand.vmem [shape: f32[4,32], index: 1, kind: output, shape index: {}]
  // Predicated region
  $region2: #{tile.8} parent=0 // pred_check
    _
  $region3: #{tile.8} parent=0 // pred_check_branch
    %3 = sbr.rel (0) target = $region5
  $region4: #{tile.8} parent=0 // pred_region
    _
  $region5: #{tile.8} parent=0 // pred_fallthru
    _
  %v4 = vld [vmem:[%s0] ss:$0 sm:$0xff]
  %5 = vst [vmem:[%s1] sm:$0xf] %v4

// kernel: biasfree_layernorm.1
$region0: #{biasfree_layernorm.1}
  #allocation0 [shape = 'u32[]', space=smem, size = 0x4, offset = 0x4, fixed_abs, tag = 'smem constant byte address 0x4 - core index']
  #allocation1 [shape = 'u32[144,128]{1,0:T(1,128)}', space=vmem, size = 0x12000, scoped, tag = 'internal scratch']
  %s0 = inlined_call_operand.vmem [shape: f32[4,128], index: 0, kind: input, shape index: {}]
  %s1 = inlined_call_operand.vmem [shape: f32[1,128], index: 1, kind: input, shape index: {}]
  %s2 = inlined_call_operand.vmem [shape: bf16[128,128], index: 2, kind: input, shape index: {}]
  %s3 = inlined_call_operand.vmem [shape: f32[4,128], index: 3, kind: output, shape index: {}]
  %s4 = sld [smem:[#allocation0]]
  $region22: #{biasfree_layernorm.1} parent=0
    _
  %s6 = ssub.s32 1, %s4
  %s7 = scalar_select 0, %s6, %s4
  // Predicated region
  $region2: #{biasfree_layernorm.1} parent=0 // pred_check
    _
  $region3: #{biasfree_layernorm.1} parent=0 // pred_check_branch
    %9 = sbr.rel (0) target = $region5
  $region4: #{biasfree_layernorm.1} parent=0 // pred_region
    _
  $region5: #{biasfree_layernorm.1} parent=0 // pred_fallthru
    _
  // Predicated region
  $region6: #{biasfree_layernorm.1} parent=0 // pred_check
    _
  $region7: #{biasfree_layernorm.1} parent=0 // pred_check_branch
    %11 = sbr.rel (0) target = $region9
  $region8: #{biasfree_layernorm.1} parent=0 // pred_region
    _
  $region9: #{biasfree_layernorm.1} parent=0 // pred_fallthru
    _
  // Predicated region
  $region10: #{biasfree_layernorm.1} parent=0 // pred_check
    _
  $region11: #{biasfree_layernorm.1} parent=0 // pred_check_branch
    %13 = sbr.rel (0) target = $region13
  $region12: #{biasfree_layernorm.1} parent=0 // pred_region
    _
  $region13: #{biasfree_layernorm.1} parent=0 // pred_fallthru
    _
  %v15 = vld [vmem:[%s0] sm:$0xf]
  %v16 = vld [vmem:[%s2] sm:$0xf]
  %v17 = vld [vmem:[%s2 + $0x4] sm:$0xf]
  %v18 = vld [vmem:[%s2 + $0x8] sm:$0xf]
  %v19 = vld [vmem:[%s2 + $0xc] sm:$0xf]
  %v20 = vld [vmem:[%s2 + $0x10] sm:$0xf]
  %v21 = vld [vmem:[%s2 + $0x14] sm:$0xf]
  %v22 = vld [vmem:[%s2 + $0x18] sm:$0xf]
  %v23 = vld [vmem:[%s2 + $0x1c] sm:$0xf]
  %v24 = vld [vmem:[%s2 + $0x20] sm:$0xf]
  %v25 = vld [vmem:[%s2 + $0x24] sm:$0xf]
  %v26 = vld [vmem:[%s2 + $0x28] sm:$0xf]
  %v27 = vld [vmem:[%s2 + $0x2c] sm:$0xf]
  %v28 = vld [vmem:[%s2 + $0x30] sm:$0xf]
  %v29 = vld [vmem:[%s2 + $0x34] sm:$0xf]
  %v30 = vld [vmem:[%s2 + $0x38] sm:$0xf]
  %v31 = vld [vmem:[%s2 + $0x3c] sm:$0xf]
  %v32 = vpack.c.bf16 %v15, %v15
  %v33 = vunpack.c.l.bf16 %v32
  %v34 = vsub.f32 %v15, %v33
  %v35 = vpack.c.bf16 %v34, %v34
  %v52 = vunpack.c.l.b16 %v16
  %v53 = vunpack.c.l.b16 %v17
  %v54 = vunpack.c.l.b16 %v18
  %v55 = vunpack.c.l.b16 %v19
  %v56 = vunpack.c.l.b16 %v20
  %v57 = vunpack.c.l.b16 %v21
  %v58 = vunpack.c.l.b16 %v22
  %v59 = vunpack.c.l.b16 %v23
  %v60 = vunpack.c.l.b16 %v24
  %v61 = vunpack.c.l.b16 %v25
  %v62 = vunpack.c.l.b16 %v26
  %v63 = vunpack.c.l.b16 %v27
  %v64 = vunpack.c.l.b16 %v28
  %v65 = vunpack.c.l.b16 %v29
  %v66 = vunpack.c.l.b16 %v30
  %v67 = vunpack.c.l.b16 %v31
  %v68 = vpack.c.b16 %v53, %v52
  %v69 = vpack.c.b16 %v55, %v54
  %v70 = vpack.c.b16 %v57, %v56
  %v71 = vpack.c.b16 %v59, %v58
  %v72 = vpack.c.b16 %v61, %v60
  %v73 = vpack.c.b16 %v63, %v62
  %v74 = vpack.c.b16 %v65, %v64
  %v75 = vpack.c.b16 %v67, %v66
  %84 = vmatprep.subr.bf16.mxu0 0
  %85 = vmatpush1.bf16.msra.mxu0 %v75
  %86 = vmatprep.subr.bf16.mxu0 0
  %87 = vmatpush1.bf16.msra.mxu0 %v74
  %88 = vmatprep.subr.bf16.mxu0 0
  %89 = vmatpush1.bf16.msra.mxu0 %v73
  %90 = vmatprep.subr.bf16.mxu0 0
  %91 = vmatpush1.bf16.msra.mxu0 %v72
  %92 = vmatprep.subr.bf16.mxu0 0
  %93 = vmatpush1.bf16.msra.mxu0 %v71
  %94 = vmatprep.subr.bf16.mxu0 0
  %95 = vmatpush1.bf16.msra.mxu0 %v70
  %96 = vmatprep.subr.bf16.mxu0 0
  %97 = vmatpush1.bf16.msra.mxu0 %v69
  %98 = vmatprep.subr.bf16.mxu0 0
  %99 = vmatpush1.bf16.msra.mxu0 %v68
  %100 = vmatprep.subr.bf16.mxu0 0
  %101 = vmatpush2.bf16.msra.mxu0 0
  %102 = vmatprep.subr.bf16.mxu0 0
  %103 = vmatpush2.bf16.msra.mxu0 0
  %104 = vmatprep.subr.bf16.mxu0 0
  %105 = vmatpush2.bf16.msra.mxu0 0
  %106 = vmatprep.subr.bf16.mxu0 0
  %107 = vmatpush2.bf16.msra.mxu0 0
  %108 = vmatprep.subr.bf16.mxu0 0
  %109 = vmatpush2.bf16.msra.mxu0 0
  %110 = vmatprep.subr.bf16.mxu0 0
  %111 = vmatpush2.bf16.msra.mxu0 0
  %112 = vmatprep.subr.bf16.mxu0 0
  %113 = vmatpush2.bf16.msra.mxu0 0
  %114 = vmatprep.subr.bf16.mxu0 0
  %115 = vmatpush2.bf16.msra.mxu0 0
  %116 = vmatprep.mubr.bf16.mxu0 0
  %117 = vmatmul.mubr.bf16.gmra.mxu0 %v35
  %v118 = vpop.f32.mrf.mxu0
  %v119 = vadd.f32 0.0, %v118
  %v120 = vpop.f32.mrf.mxu0
  %v121 = vpop.f32.mrf.mxu0
  %v122 = vpop.f32.mrf.mxu0
  %123 = vdwg.mxu0
  %124 = vmatprep.subr.bf16.mxu0 0
  %125 = vmatpush1.bf16.msra.mxu0 %v75
  %126 = vmatprep.subr.bf16.mxu0 0
  %127 = vmatpush1.bf16.msra.mxu0 %v74
  %128 = vmatprep.subr.bf16.mxu0 0
  %129 = vmatpush1.bf16.msra.mxu0 %v73
  %130 = vmatprep.subr.bf16.mxu0 0
  %131 = vmatpush1.bf16.msra.mxu0 %v72
  %132 = vmatprep.subr.bf16.mxu0 0
  %133 = vmatpush1.bf16.msra.mxu0 %v71
  %134 = vmatprep.subr.bf16.mxu0 0
  %135 = vmatpush1.bf16.msra.mxu0 %v70
  %136 = vmatprep.subr.bf16.mxu0 0
  %137 = vmatpush1.bf16.msra.mxu0 %v69
  %138 = vmatprep.subr.bf16.mxu0 0
  %139 = vmatpush1.bf16.msra.mxu0 %v68
  %140 = vmatprep.subr.bf16.mxu0 0
  %141 = vmatpush2.bf16.msra.mxu0 0
  %142 = vmatprep.subr.bf16.mxu0 0
  %143 = vmatpush2.bf16.msra.mxu0 0
  %144 = vmatprep.subr.bf16.mxu0 0
  %145 = vmatpush2.bf16.msra.mxu0 0
  %146 = vmatprep.subr.bf16.mxu0 0
  %147 = vmatpush2.bf16.msra.mxu0 0
  %148 = vmatprep.subr.bf16.mxu0 0
  %149 = vmatpush2.bf16.msra.mxu0 0
  %150 = vmatprep.subr.bf16.mxu0 0
  %151 = vmatpush2.bf16.msra.mxu0 0
  %152 = vmatprep.subr.bf16.mxu0 0
  %153 = vmatpush2.bf16.msra.mxu0 0
  %154 = vmatprep.subr.bf16.mxu0 0
  %155 = vmatpush2.bf16.msra.mxu0 0
  %156 = vmatprep.mubr.bf16.mxu0 0
  %157 = vmatmul.mubr.bf16.gmra.mxu0 %v32
  %v158 = vpop.f32.mrf.mxu0
  %v159 = vadd.f32 %v119, %v158
  %v160 = vpop.f32.mrf.mxu0
  %v161 = vpop.f32.mrf.mxu0
  %v162 = vpop.f32.mrf.mxu0
  %163 = vdwg.mxu0
  %v164 = vmul.f32 %v159, 0.03125
  %v165 = vsub.f32 %v15, %v164
  %v166 = vmul.f32 %v165, %v165
  %v167 = vpack.c.bf16 %v166, %v166
  %v168 = vunpack.c.l.bf16 %v167
  %v169 = vsub.f32 %v166, %v168
  %v170 = vpack.c.bf16 %v169, %v169
  %171 = vmatprep.subr.bf16.mxu0 0
  %172 = vmatpush1.bf16.msra.mxu0 %v75
  %173 = vmatprep.subr.bf16.mxu0 0
  %174 = vmatpush1.bf16.msra.mxu0 %v74
  %175 = vmatprep.subr.bf16.mxu0 0
  %176 = vmatpush1.bf16.msra.mxu0 %v73
  %177 = vmatprep.subr.bf16.mxu0 0
  %178 = vmatpush1.bf16.msra.mxu0 %v72
  %179 = vmatprep.subr.bf16.mxu0 0
  %180 = vmatpush1.bf16.msra.mxu0 %v71
  %181 = vmatprep.subr.bf16.mxu0 0
  %182 = vmatpush1.bf16.msra.mxu0 %v70
  %183 = vmatprep.subr.bf16.mxu0 0
  %184 = vmatpush1.bf16.msra.mxu0 %v69
  %185 = vmatprep.subr.bf16.mxu0 0
  %186 = vmatpush1.bf16.msra.mxu0 %v68
  %187 = vmatprep.subr.bf16.mxu0 0
  %188 = vmatpush2.bf16.msra.mxu0 0
  %189 = vmatprep.subr.bf16.mxu0 0
  %190 = vmatpush2.bf16.msra.mxu0 0
  %191 = vmatprep.subr.bf16.mxu0 0
  %192 = vmatpush2.bf16.msra.mxu0 0
  %193 = vmatprep.subr.bf16.mxu0 0
  %194 = vmatpush2.bf16.msra.mxu0 0
  %195 = vmatprep.subr.bf16.mxu0 0
  %196 = vmatpush2.bf16.msra.mxu0 0
  %197 = vmatprep.subr.bf16.mxu0 0
  %198 = vmatpush2.bf16.msra.mxu0 0
  %199 = vmatprep.subr.bf16.mxu0 0
  %200 = vmatpush2.bf16.msra.mxu0 0
  %201 = vmatprep.subr.bf16.mxu0 0
  %202 = vmatpush2.bf16.msra.mxu0 0
  %203 = vmatprep.mubr.bf16.mxu0 0
  %204 = vmatmul.mubr.bf16.gmra.mxu0 %v170
  %v205 = vpop.f32.mrf.mxu0
  %v206 = vadd.f32 0.0, %v205
  %v207 = vpop.f32.mrf.mxu0
  %v208 = vpop.f32.mrf.mxu0
  %v209 = vpop.f32.mrf.mxu0
  %210 = vdwg.mxu0
  %211 = vmatprep.subr.bf16.mxu0 0
  %212 = vmatpush1.bf16.msra.mxu0 %v75
  %213 = vmatprep.subr.bf16.mxu0 0
  %214 = vmatpush1.bf16.msra.mxu0 %v74
  %215 = vmatprep.subr.bf16.mxu0 0
  %216 = vmatpush1.bf16.msra.mxu0 %v73
  %217 = vmatprep.subr.bf16.mxu0 0
  %218 = vmatpush1.bf16.msra.mxu0 %v72
  %219 = vmatprep.subr.bf16.mxu0 0
  %220 = vmatpush1.bf16.msra.mxu0 %v71
  %221 = vmatprep.subr.bf16.mxu0 0
  %222 = vmatpush1.bf16.msra.mxu0 %v70
  %223 = vmatprep.subr.bf16.mxu0 0
  %224 = vmatpush1.bf16.msra.mxu0 %v69
  %225 = vmatprep.subr.bf16.mxu0 0
  %226 = vmatpush1.bf16.msra.mxu0 %v68
  %227 = vmatprep.subr.bf16.mxu0 0
  %228 = vmatpush2.bf16.msra.mxu0 0
  %229 = vmatprep.subr.bf16.mxu0 0
  %230 = vmatpush2.bf16.msra.mxu0 0
  %231 = vmatprep.subr.bf16.mxu0 0
  %232 = vmatpush2.bf16.msra.mxu0 0
  %233 = vmatprep.subr.bf16.mxu0 0
  %234 = vmatpush2.bf16.msra.mxu0 0
  %235 = vmatprep.subr.bf16.mxu0 0
  %236 = vmatpush2.bf16.msra.mxu0 0
  %237 = vmatprep.subr.bf16.mxu0 0
  %238 = vmatpush2.bf16.msra.mxu0 0
  %239 = vmatprep.subr.bf16.mxu0 0
  %240 = vmatpush2.bf16.msra.mxu0 0
  %241 = vmatprep.subr.bf16.mxu0 0
  %242 = vmatpush2.bf16.msra.mxu0 0
  %243 = vmatprep.mubr.bf16.mxu0 0
  %244 = vmatmul.mubr.bf16.gmra.mxu0 %v167
  %v245 = vpop.f32.mrf.mxu0
  %v246 = vadd.f32 %v206, %v245
  %v247 = vpop.f32.mrf.mxu0
  %v248 = vpop.f32.mrf.mxu0
  %v249 = vpop.f32.mrf.mxu0
  %250 = vdwg.mxu0
  %v251 = vmul.f32 %v246, 0.03125
  %v252 = vmax.f32 %v251, 0.0
  %v253 = vadd.f32 %v252, 1e-05
  %v254 = vrsqrt.pop %v253
  %v255 = vld [vmem:[%s1] sm:$0x1]
  %v256 = vmul.f32 %v15, %v254
  %v258 = vlaneseq
  %v259 = vshrl.u32 %v258, 7
  %v260 = vsub.s32 0, %v259
  %v261 = vrot.slane %v255, %v260
  %v263 = vmul.f32 %v256, %v261
  %264 = vst [vmem:[%s3] sm:$0xf] %v263
  // Predicated region
  $region14: #{biasfree_layernorm.1} parent=0 // pred_check
    _
  $region15: #{biasfree_layernorm.1} parent=0 // pred_check_branch
    %266 = sbr.rel (0) target = $region17
  $region16: #{biasfree_layernorm.1} parent=0 // pred_region
    _
  $region17: #{biasfree_layernorm.1} parent=0 // pred_fallthru
    _
  // Predicated region
  $region18: #{biasfree_layernorm.1} parent=0 // pred_check
    _
  $region19: #{biasfree_layernorm.1} parent=0 // pred_check_branch
    %268 = sbr.rel (0) target = $region21
  $region20: #{biasfree_layernorm.1} parent=0 // pred_region
    _
  $region21: #{biasfree_layernorm.1} parent=0 // pred_fallthru
    _

</llo_original>
